<compile_context>
chip_gen: v5e
topology: v5e:2x2
jax: 0.10.0
libtpu: 0.0.40
codegen_flags: <defaults>
</compile_context>

<pallas_src>
import jax
import jax.numpy as jnp
from jax.experimental import pallas as pl
from jax.experimental.pallas import tpu as pltpu


def _round_up(n, m):
    return ((n + m - 1) // m) * m


def _make_kernel(seq_len, t_chunk, unroll):
    """Build the kernel body, closing over static sizes (seq_len, chunk, unroll)."""

    def kernel(x_ref, wih_ref, whh_ref, b_ref, wfc_ref, bfc_ref, out_ref, h_ref):
        # x_ref   : (TC, BT, Ip) bf16   time chunk of time-major padded input
        # wih_ref : (Ip, Hp)     bf16   W_ih^T (zero-padded)
        # whh_ref : (Hp, Hp)     bf16   W_hh^T (zero-padded)
        # b_ref   : (1, Hp)      f32    b_ih + b_hh (zero-padded)
        # wfc_ref : (Hp, Op)     bf16   W_fc^T (zero-padded)
        # bfc_ref : (1, Op)      f32    b_fc (zero-padded)
        # out_ref : (BT, Op)     f32    lane-dense padded output tile
        # h_ref   : (BT, Hp)     f32    hidden state carried across time chunks
        tc = pl.program_id(1)
        n_tc = pl.num_programs(1)

        # New batch tile (first time chunk): h0 = 0.
        @pl.when(tc == 0)
        def _():
            h_ref[...] = jnp.zeros_like(h_ref)

        wih = wih_ref[...]   # resident across the unrolled loop
        whh = whh_ref[...]
        bias = b_ref[...]
        base_t = tc * t_chunk

        def step(t, h):
            # Input projection is off the serial h-chain; with the loop unrolled
            # the LLO scheduler overlaps this matmul with the previous tanh.
            p_t = jnp.dot(x_ref[t], wih, preferred_element_type=jnp.float32)
            h_new = jnp.tanh(
                p_t + bias
                + jnp.dot(h.astype(jnp.bfloat16), whh,
                          preferred_element_type=jnp.float32))
            if seq_len % t_chunk != 0:
                # Zero-padded (beyond-seq_len) time steps are no-ops on h.
                h_new = jnp.where(base_t + t < seq_len, h_new, h)
            return h_new

        h_ref[...] = jax.lax.fori_loop(0, t_chunk, step, h_ref[...],
                                       unroll=unroll)

        # Last time chunk: Dropout is identity in eval; final Linear on the last
        # hidden state, stored as a lane-dense (BT, Op) tile.
        @pl.when(tc == n_tc - 1)
        def _():
            out_ref[...] = (
                jnp.dot(h_ref[...].astype(jnp.bfloat16), wfc_ref[...],
                        preferred_element_type=jnp.float32)
                + bfc_ref[...])

    return kernel


def prepare_simple_rnn_params(W_ih, W_hh, b_ih, b_hh, W_fc, b_fc):
    """Pad / transpose / cast the PyTorch-shaped params ONCE (not per call).

    Matmul operands are bf16 (MXU-native on v5e/v6e/v7x); biases stay f32 and
    all matmuls accumulate in f32.  Zero padding is exact: padded hidden
    columns/rows stay identically 0 through the recurrence.
    """
    H, I = W_ih.shape
    O = W_fc.shape[0]
    Ip = _round_up(I, 128)
    Hp = _round_up(H, 128)
    Op = _round_up(O, 128)

    wih_p = jnp.zeros((Ip, Hp), jnp.bfloat16).at[:I, :H].set(
        W_ih.T.astype(jnp.bfloat16))
    whh_p = jnp.zeros((Hp, Hp), jnp.bfloat16).at[:H, :H].set(
        W_hh.T.astype(jnp.bfloat16))
    b_p = jnp.zeros((1, Hp), jnp.float32).at[0, :H].set(
        (b_ih + b_hh).astype(jnp.float32))
    wfc_p = jnp.zeros((Hp, Op), jnp.bfloat16).at[:H, :O].set(
        W_fc.T.astype(jnp.bfloat16))
    bfc_p = jnp.zeros((1, Op), jnp.float32).at[0, :O].set(
        b_fc.astype(jnp.float32))

    return {"wih": wih_p, "whh": whh_p, "b": b_p, "wfc": wfc_p, "bfc": bfc_p,
            "in_features": I, "out_features": O}


def simple_rnn_forward(x, params, *, batch_tile=None, time_chunk=None, unroll=8):
    """x: (B, T, I) batch-first float32.  Returns (B, O) float32."""
    B, T, I = x.shape
    assert I == params["in_features"]
    Ip, Hp = params["wih"].shape
    Op = params["wfc"].shape[1]
    O = params["out_features"]

    # Batch tiling: one (BT, Hp) recurrence per tile; the batch grid axis is
    # "parallel" so v7x's two TensorCores split it at production batch sizes.
    # 16-row alignment keeps bf16 blocks on native (16, 128) sublane tiling.
    if batch_tile is None:
        batch_tile = min(_round_up(B, 16), 256)
    BT = _round_up(batch_tile, 16)
    Bp = _round_up(B, BT)
    grid_b = Bp // BT

    # Time chunking keeps x windowed in VMEM (double-buffered by the pipeline)
    # instead of fully resident -> scales to large T on v7x's 64 MiB VMEM.
    if time_chunk is None:
        time_chunk = min(T, 128)
    TC = time_chunk
    Tp = _round_up(T, TC)
    grid_t = Tp // TC

    # Time-major, zero-padded, bf16 input.
    x_tm = jnp.transpose(x, (1, 0, 2)).astype(jnp.bfloat16)        # (T, B, I)
    x_p = jnp.zeros((Tp, Bp, Ip), jnp.bfloat16).at[:T, :B, :I].set(x_tm)

    kernel = _make_kernel(seq_len=T, t_chunk=TC, unroll=max(1, min(unroll, TC)))

    out_p = pl.pallas_call(
        kernel,
        out_shape=jax.ShapeDtypeStruct((Bp, Op), jnp.float32),
        grid_spec=pltpu.PrefetchScalarGridSpec(
            num_scalar_prefetch=0,
            grid=(grid_b, grid_t),
            in_specs=[
                pl.BlockSpec((TC, BT, Ip), lambda b, t: (t, b, 0)),   # x chunk
                pl.BlockSpec((Ip, Hp), lambda b, t: (0, 0)),          # W_ih^T
                pl.BlockSpec((Hp, Hp), lambda b, t: (0, 0)),          # W_hh^T
                pl.BlockSpec((1, Hp), lambda b, t: (0, 0)),           # bias
                pl.BlockSpec((Hp, Op), lambda b, t: (0, 0)),          # W_fc^T
                pl.BlockSpec((1, Op), lambda b, t: (0, 0)),           # b_fc
            ],
            out_specs=pl.BlockSpec((BT, Op), lambda b, t: (b, 0)),
            scratch_shapes=[pltpu.VMEM((BT, Hp), jnp.float32)],       # hidden h
        ),
        compiler_params=pltpu.CompilerParams(
            dimension_semantics=("parallel", "arbitrary")),
    )(x_p, params["wih"], params["whh"], params["b"],
      params["wfc"], params["bfc"])

    return out_p[:B, :O]


def reference_forward(x, W_ih, W_hh, b_ih, b_hh, W_fc, b_fc):
    """Pure-JAX f32 reference (lax.scan) matching torch.nn.RNN(tanh) + Linear."""
    B = x.shape[0]
    H = W_hh.shape[0]

    def step(h, x_t):
        return jnp.tanh(x_t @ W_ih.T + h @ W_hh.T + b_ih + b_hh), None

    h0 = jnp.zeros((B, H), jnp.float32)
    hT, _ = jax.lax.scan(step, h0, jnp.transpose(x, (1, 0, 2)))
    return hT @ W_fc.T + b_fc


if __name__ == "__main__":
    # Module spec: input_size=5, hidden_size=50, output_size=1; small B/T.
    B, T = 2, 8
    I, H, O = 5, 50, 1

    key = jax.random.PRNGKey(0)
    k_x, k_wih, k_whh, k_bih, k_bhh, k_wfc, k_bfc = jax.random.split(key, 7)

    scale = 1.0 / (H ** 0.5)
    W_ih = jax.random.uniform(k_wih, (H, I), jnp.float32, -scale, scale)
    W_hh = jax.random.uniform(k_whh, (H, H), jnp.float32, -scale, scale)
    b_ih = jax.random.uniform(k_bih, (H,), jnp.float32, -scale, scale)
    b_hh = jax.random.uniform(k_bhh, (H,), jnp.float32, -scale, scale)
    W_fc = jax.random.uniform(k_wfc, (O, H), jnp.float32, -scale, scale)
    b_fc = jax.random.uniform(k_bfc, (O,), jnp.float32, -scale, scale)

    x = jax.random.normal(k_x, (B, T, I), jnp.float32)

    params = prepare_simple_rnn_params(W_ih, W_hh, b_ih, b_hh, W_fc, b_fc)
    out = simple_rnn_forward(x, params)
    out = jax.block_until_ready(out)

    ref = reference_forward(x, W_ih, W_hh, b_ih, b_hh, W_fc, b_fc)
    assert out.shape == (B, O), out.shape
    # bf16 matmul operands (f32 accumulation) => relaxed tolerance vs f32 ref.
    assert jnp.allclose(out, ref, atol=2e-2, rtol=2e-2), (out, ref)

    print("KERNEL_OK")
</pallas_src>

<mosaic_0001>
module attributes {stable_mosaic.version = 11 : i64} {
  func.func @kernel(%arg0: i32, %arg1: i32, %arg2: memref<8x16x128xbf16, #tpu.memory_space<vmem>>, %arg3: memref<128x128xbf16, #tpu.memory_space<vmem>>, %arg4: memref<128x128xbf16, #tpu.memory_space<vmem>>, %arg5: memref<1x128xf32, #tpu.memory_space<vmem>>, %arg6: memref<128x128xbf16, #tpu.memory_space<vmem>>, %arg7: memref<1x128xf32, #tpu.memory_space<vmem>>, %arg8: memref<16x128xf32, #tpu.memory_space<vmem>>, %arg9: memref<16x128xf32, #tpu.memory_space<vmem>>) attributes {dimension_semantics = [#tpu.dimension_semantics<parallel>, #tpu.dimension_semantics<arbitrary>], iteration_bounds = array<i64: 1, 1>, scalar_prefetch = 0 : i64, scratch_operands = 1 : i64, tpu.core_type = #tpu.core_type<tc>, window_params = [{transform_indices = @transform_0, window_bounds = array<i64: 8, 16, 128>}, {pipeline_mode = #tpu.pipeline_mode<synchronous>, transform_indices = @transform_1, window_bounds = array<i64: 128, 128>}, {pipeline_mode = #tpu.pipeline_mode<synchronous>, transform_indices = @transform_2, window_bounds = array<i64: 128, 128>}, {pipeline_mode = #tpu.pipeline_mode<synchronous>, transform_indices = @transform_3, window_bounds = array<i64: 1, 128>}, {pipeline_mode = #tpu.pipeline_mode<synchronous>, transform_indices = @transform_4, window_bounds = array<i64: 128, 128>}, {pipeline_mode = #tpu.pipeline_mode<synchronous>, transform_indices = @transform_5, window_bounds = array<i64: 1, 128>}, {transform_indices = @transform_6, window_bounds = array<i64: 16, 128>}]} {
    %c0_i32 = arith.constant 0 : i32
    %0 = arith.cmpi eq, %arg1, %c0_i32 : i32
    %1 = arith.extui %0 : i1 to i32
    %c0_i32_0 = arith.constant 0 : i32
    %2 = arith.cmpi ne, %1, %c0_i32_0 : i32
    scf.if %2 {
      %cst_44 = arith.constant 0.000000e+00 : f32
      %91 = vector.broadcast %cst_44 : f32 to vector<16x128xf32>
      %c0_45 = arith.constant 0 : index
      %c0_46 = arith.constant 0 : index
      %92 = vector.load %arg9[%c0_45, %c0_46] : memref<16x128xf32, #tpu.memory_space<vmem>>, vector<16x128xf32>
      tpu.vector_store %arg9[%c0_45, %c0_46], %91 {strides = array<i32>} : memref<16x128xf32, #tpu.memory_space<vmem>>, vector<16x128xf32>,
    } else {
    }
    %c0 = arith.constant 0 : index
    %c0_1 = arith.constant 0 : index
    %3 = vector.load %arg3[%c0, %c0_1] : memref<128x128xbf16, #tpu.memory_space<vmem>>, vector<128x128xbf16>
    %c0_2 = arith.constant 0 : index
    %c0_3 = arith.constant 0 : index
    %4 = vector.load %arg4[%c0_2, %c0_3] : memref<128x128xbf16, #tpu.memory_space<vmem>>, vector<128x128xbf16>
    %c0_4 = arith.constant 0 : index
    %c0_5 = arith.constant 0 : index
    %5 = vector.load %arg5[%c0_4, %c0_5] : memref<1x128xf32, #tpu.memory_space<vmem>>, vector<1x128xf32>
    %c0_6 = arith.constant 0 : index
    %c0_7 = arith.constant 0 : index
    %6 = vector.load %arg9[%c0_6, %c0_7] : memref<16x128xf32, #tpu.memory_space<vmem>>, vector<16x128xf32>
    %c0_i32_8 = arith.constant 0 : i32
    %7 = arith.index_cast %c0_i32_8 : i32 to index
    %c0_9 = arith.constant 0 : index
    %c0_10 = arith.constant 0 : index
    %8 = vector.load %arg2[%7, %c0_9, %c0_10] : memref<8x16x128xbf16, #tpu.memory_space<vmem>>, vector<1x16x128xbf16>
    %9 = vector.shape_cast %8 : vector<1x16x128xbf16> to vector<16x128xbf16>
    %cst = arith.constant dense<0.000000e+00> : vector<16x128xf32>
    %10 = tpu.matmul %9, %3, %cst {dimension_numbers = #tpu.dot_dimension_numbers<[1], [0], [0], [1], [0, 0, 1, 1], [], []>} : vector<16x128xbf16>, vector<128x128xbf16>, vector<16x128xf32> -> vector<16x128xf32>
    %11 = vector.broadcast %5 : vector<1x128xf32> to vector<16x128xf32>
    %12 = arith.addf %10, %11 : vector<16x128xf32>
    %13 = arith.truncf %6 : vector<16x128xf32> to vector<16x128xbf16>
    %cst_11 = arith.constant dense<0.000000e+00> : vector<16x128xf32>
    %14 = tpu.matmul %13, %4, %cst_11 {dimension_numbers = #tpu.dot_dimension_numbers<[1], [0], [0], [1], [0, 0, 1, 1], [], []>} : vector<16x128xbf16>, vector<128x128xbf16>, vector<16x128xf32> -> vector<16x128xf32>
    %15 = arith.addf %12, %14 : vector<16x128xf32>
    %16 = math.tanh %15 : vector<16x128xf32>
    %c1_i32 = arith.constant 1 : i32
    %17 = arith.index_cast %c1_i32 : i32 to index
    %c0_12 = arith.constant 0 : index
    %c0_13 = arith.constant 0 : index
    %18 = vector.load %arg2[%17, %c0_12, %c0_13] : memref<8x16x128xbf16, #tpu.memory_space<vmem>>, vector<1x16x128xbf16>
    %19 = vector.shape_cast %18 : vector<1x16x128xbf16> to vector<16x128xbf16>
    %cst_14 = arith.constant dense<0.000000e+00> : vector<16x128xf32>
    %20 = tpu.matmul %19, %3, %cst_14 {dimension_numbers = #tpu.dot_dimension_numbers<[1], [0], [0], [1], [0, 0, 1, 1], [], []>} : vector<16x128xbf16>, vector<128x128xbf16>, vector<16x128xf32> -> vector<16x128xf32>
    %21 = vector.broadcast %5 : vector<1x128xf32> to vector<16x128xf32>
    %22 = arith.addf %20, %21 : vector<16x128xf32>
    %23 = arith.truncf %16 : vector<16x128xf32> to vector<16x128xbf16>
    %cst_15 = arith.constant dense<0.000000e+00> : vector<16x128xf32>
    %24 = tpu.matmul %23, %4, %cst_15 {dimension_numbers = #tpu.dot_dimension_numbers<[1], [0], [0], [1], [0, 0, 1, 1], [], []>} : vector<16x128xbf16>, vector<128x128xbf16>, vector<16x128xf32> -> vector<16x128xf32>
    %25 = arith.addf %22, %24 : vector<16x128xf32>
    %26 = math.tanh %25 : vector<16x128xf32>
    %c2_i32 = arith.constant 2 : i32
    %27 = arith.index_cast %c2_i32 : i32 to index
    %c0_16 = arith.constant 0 : index
    %c0_17 = arith.constant 0 : index
    %28 = vector.load %arg2[%27, %c0_16, %c0_17] : memref<8x16x128xbf16, #tpu.memory_space<vmem>>, vector<1x16x128xbf16>
    %29 = vector.shape_cast %28 : vector<1x16x128xbf16> to vector<16x128xbf16>
    %cst_18 = arith.constant dense<0.000000e+00> : vector<16x128xf32>
    %30 = tpu.matmul %29, %3, %cst_18 {dimension_numbers = #tpu.dot_dimension_numbers<[1], [0], [0], [1], [0, 0, 1, 1], [], []>} : vector<16x128xbf16>, vector<128x128xbf16>, vector<16x128xf32> -> vector<16x128xf32>
    %31 = vector.broadcast %5 : vector<1x128xf32> to vector<16x128xf32>
    %32 = arith.addf %30, %31 : vector<16x128xf32>
    %33 = arith.truncf %26 : vector<16x128xf32> to vector<16x128xbf16>
    %cst_19 = arith.constant dense<0.000000e+00> : vector<16x128xf32>
    %34 = tpu.matmul %33, %4, %cst_19 {dimension_numbers = #tpu.dot_dimension_numbers<[1], [0], [0], [1], [0, 0, 1, 1], [], []>} : vector<16x128xbf16>, vector<128x128xbf16>, vector<16x128xf32> -> vector<16x128xf32>
    %35 = arith.addf %32, %34 : vector<16x128xf32>
    %36 = math.tanh %35 : vector<16x128xf32>
    %c3_i32 = arith.constant 3 : i32
    %37 = arith.index_cast %c3_i32 : i32 to index
    %c0_20 = arith.constant 0 : index
    %c0_21 = arith.constant 0 : index
    %38 = vector.load %arg2[%37, %c0_20, %c0_21] : memref<8x16x128xbf16, #tpu.memory_space<vmem>>, vector<1x16x128xbf16>
    %39 = vector.shape_cast %38 : vector<1x16x128xbf16> to vector<16x128xbf16>
    %cst_22 = arith.constant dense<0.000000e+00> : vector<16x128xf32>
    %40 = tpu.matmul %39, %3, %cst_22 {dimension_numbers = #tpu.dot_dimension_numbers<[1], [0], [0], [1], [0, 0, 1, 1], [], []>} : vector<16x128xbf16>, vector<128x128xbf16>, vector<16x128xf32> -> vector<16x128xf32>
    %41 = vector.broadcast %5 : vector<1x128xf32> to vector<16x128xf32>
    %42 = arith.addf %40, %41 : vector<16x128xf32>
    %43 = arith.truncf %36 : vector<16x128xf32> to vector<16x128xbf16>
    %cst_23 = arith.constant dense<0.000000e+00> : vector<16x128xf32>
    %44 = tpu.matmul %43, %4, %cst_23 {dimension_numbers = #tpu.dot_dimension_numbers<[1], [0], [0], [1], [0, 0, 1, 1], [], []>} : vector<16x128xbf16>, vector<128x128xbf16>, vector<16x128xf32> -> vector<16x128xf32>
    %45 = arith.addf %42, %44 : vector<16x128xf32>
    %46 = math.tanh %45 : vector<16x128xf32>
    %c4_i32 = arith.constant 4 : i32
    %47 = arith.index_cast %c4_i32 : i32 to index
    %c0_24 = arith.constant 0 : index
    %c0_25 = arith.constant 0 : index
    %48 = vector.load %arg2[%47, %c0_24, %c0_25] : memref<8x16x128xbf16, #tpu.memory_space<vmem>>, vector<1x16x128xbf16>
    %49 = vector.shape_cast %48 : vector<1x16x128xbf16> to vector<16x128xbf16>
    %cst_26 = arith.constant dense<0.000000e+00> : vector<16x128xf32>
    %50 = tpu.matmul %49, %3, %cst_26 {dimension_numbers = #tpu.dot_dimension_numbers<[1], [0], [0], [1], [0, 0, 1, 1], [], []>} : vector<16x128xbf16>, vector<128x128xbf16>, vector<16x128xf32> -> vector<16x128xf32>
    %51 = vector.broadcast %5 : vector<1x128xf32> to vector<16x128xf32>
    %52 = arith.addf %50, %51 : vector<16x128xf32>
    %53 = arith.truncf %46 : vector<16x128xf32> to vector<16x128xbf16>
    %cst_27 = arith.constant dense<0.000000e+00> : vector<16x128xf32>
    %54 = tpu.matmul %53, %4, %cst_27 {dimension_numbers = #tpu.dot_dimension_numbers<[1], [0], [0], [1], [0, 0, 1, 1], [], []>} : vector<16x128xbf16>, vector<128x128xbf16>, vector<16x128xf32> -> vector<16x128xf32>
    %55 = arith.addf %52, %54 : vector<16x128xf32>
    %56 = math.tanh %55 : vector<16x128xf32>
    %c5_i32 = arith.constant 5 : i32
    %57 = arith.index_cast %c5_i32 : i32 to index
    %c0_28 = arith.constant 0 : index
    %c0_29 = arith.constant 0 : index
    %58 = vector.load %arg2[%57, %c0_28, %c0_29] : memref<8x16x128xbf16, #tpu.memory_space<vmem>>, vector<1x16x128xbf16>
    %59 = vector.shape_cast %58 : vector<1x16x128xbf16> to vector<16x128xbf16>
    %cst_30 = arith.constant dense<0.000000e+00> : vector<16x128xf32>
    %60 = tpu.matmul %59, %3, %cst_30 {dimension_numbers = #tpu.dot_dimension_numbers<[1], [0], [0], [1], [0, 0, 1, 1], [], []>} : vector<16x128xbf16>, vector<128x128xbf16>, vector<16x128xf32> -> vector<16x128xf32>
    %61 = vector.broadcast %5 : vector<1x128xf32> to vector<16x128xf32>
    %62 = arith.addf %60, %61 : vector<16x128xf32>
    %63 = arith.truncf %56 : vector<16x128xf32> to vector<16x128xbf16>
    %cst_31 = arith.constant dense<0.000000e+00> : vector<16x128xf32>
    %64 = tpu.matmul %63, %4, %cst_31 {dimension_numbers = #tpu.dot_dimension_numbers<[1], [0], [0], [1], [0, 0, 1, 1], [], []>} : vector<16x128xbf16>, vector<128x128xbf16>, vector<16x128xf32> -> vector<16x128xf32>
    %65 = arith.addf %62, %64 : vector<16x128xf32>
    %66 = math.tanh %65 : vector<16x128xf32>
    %c6_i32 = arith.constant 6 : i32
    %67 = arith.index_cast %c6_i32 : i32 to index
    %c0_32 = arith.constant 0 : index
    %c0_33 = arith.constant 0 : index
    %68 = vector.load %arg2[%67, %c0_32, %c0_33] : memref<8x16x128xbf16, #tpu.memory_space<vmem>>, vector<1x16x128xbf16>
    %69 = vector.shape_cast %68 : vector<1x16x128xbf16> to vector<16x128xbf16>
    %cst_34 = arith.constant dense<0.000000e+00> : vector<16x128xf32>
    %70 = tpu.matmul %69, %3, %cst_34 {dimension_numbers = #tpu.dot_dimension_numbers<[1], [0], [0], [1], [0, 0, 1, 1], [], []>} : vector<16x128xbf16>, vector<128x128xbf16>, vector<16x128xf32> -> vector<16x128xf32>
    %71 = vector.broadcast %5 : vector<1x128xf32> to vector<16x128xf32>
    %72 = arith.addf %70, %71 : vector<16x128xf32>
    %73 = arith.truncf %66 : vector<16x128xf32> to vector<16x128xbf16>
    %cst_35 = arith.constant dense<0.000000e+00> : vector<16x128xf32>
    %74 = tpu.matmul %73, %4, %cst_35 {dimension_numbers = #tpu.dot_dimension_numbers<[1], [0], [0], [1], [0, 0, 1, 1], [], []>} : vector<16x128xbf16>, vector<128x128xbf16>, vector<16x128xf32> -> vector<16x128xf32>
    %75 = arith.addf %72, %74 : vector<16x128xf32>
    %76 = math.tanh %75 : vector<16x128xf32>
    %c7_i32 = arith.constant 7 : i32
    %77 = arith.index_cast %c7_i32 : i32 to index
    %c0_36 = arith.constant 0 : index
    %c0_37 = arith.constant 0 : index
    %78 = vector.load %arg2[%77, %c0_36, %c0_37] : memref<8x16x128xbf16, #tpu.memory_space<vmem>>, vector<1x16x128xbf16>
    %79 = vector.shape_cast %78 : vector<1x16x128xbf16> to vector<16x128xbf16>
    %cst_38 = arith.constant dense<0.000000e+00> : vector<16x128xf32>
    %80 = tpu.matmul %79, %3, %cst_38 {dimension_numbers = #tpu.dot_dimension_numbers<[1], [0], [0], [1], [0, 0, 1, 1], [], []>} : vector<16x128xbf16>, vector<128x128xbf16>, vector<16x128xf32> -> vector<16x128xf32>
    %81 = vector.broadcast %5 : vector<1x128xf32> to vector<16x128xf32>
    %82 = arith.addf %80, %81 : vector<16x128xf32>
    %83 = arith.truncf %76 : vector<16x128xf32> to vector<16x128xbf16>
    %cst_39 = arith.constant dense<0.000000e+00> : vector<16x128xf32>
    %84 = tpu.matmul %83, %4, %cst_39 {dimension_numbers = #tpu.dot_dimension_numbers<[1], [0], [0], [1], [0, 0, 1, 1], [], []>} : vector<16x128xbf16>, vector<128x128xbf16>, vector<16x128xf32> -> vector<16x128xf32>
    %85 = arith.addf %82, %84 : vector<16x128xf32>
    %86 = math.tanh %85 : vector<16x128xf32>
    %c8_i32 = arith.constant 8 : i32
    %c0_40 = arith.constant 0 : index
    %c0_41 = arith.constant 0 : index
    %87 = vector.load %arg9[%c0_40, %c0_41] : memref<16x128xf32, #tpu.memory_space<vmem>>, vector<16x128xf32>
    tpu.vector_store %arg9[%c0_40, %c0_41], %86 {strides = array<i32>} : memref<16x128xf32, #tpu.memory_space<vmem>>, vector<16x128xf32>,
    %c0_i32_42 = arith.constant 0 : i32
    %88 = arith.cmpi eq, %arg1, %c0_i32_42 : i32
    %89 = arith.extui %88 : i1 to i32
    %c0_i32_43 = arith.constant 0 : i32
    %90 = arith.cmpi ne, %89, %c0_i32_43 : i32
    scf.if %90 {
      %c0_44 = arith.constant 0 : index
      %c0_45 = arith.constant 0 : index
      %91 = vector.load %arg9[%c0_44, %c0_45] : memref<16x128xf32, #tpu.memory_space<vmem>>, vector<16x128xf32>
      %92 = arith.truncf %91 : vector<16x128xf32> to vector<16x128xbf16>
      %c0_46 = arith.constant 0 : index
      %c0_47 = arith.constant 0 : index
      %93 = vector.load %arg6[%c0_46, %c0_47] : memref<128x128xbf16, #tpu.memory_space<vmem>>, vector<128x128xbf16>
      %cst_48 = arith.constant dense<0.000000e+00> : vector<16x128xf32>
      %94 = tpu.matmul %92, %93, %cst_48 {dimension_numbers = #tpu.dot_dimension_numbers<[1], [0], [0], [1], [0, 0, 1, 1], [], []>} : vector<16x128xbf16>, vector<128x128xbf16>, vector<16x128xf32> -> vector<16x128xf32>
      %c0_49 = arith.constant 0 : index
      %c0_50 = arith.constant 0 : index
      %95 = vector.load %arg7[%c0_49, %c0_50] : memref<1x128xf32, #tpu.memory_space<vmem>>, vector<1x128xf32>
      %96 = vector.broadcast %95 : vector<1x128xf32> to vector<16x128xf32>
      %97 = arith.addf %94, %96 : vector<16x128xf32>
      %c0_51 = arith.constant 0 : index
      %c0_52 = arith.constant 0 : index
      %98 = vector.load %arg8[%c0_51, %c0_52] : memref<16x128xf32, #tpu.memory_space<vmem>>, vector<16x128xf32>
      tpu.vector_store %arg8[%c0_51, %c0_52], %97 {strides = array<i32>} : memref<16x128xf32, #tpu.memory_space<vmem>>, vector<16x128xf32>,
    } else {
    }
    return
  }
  func.func @transform_0(%arg0: i32, %arg1: i32) -> (i32, i32, i32) {
    %c0_i32 = arith.constant 0 : i32
    %c0_i32_0 = arith.constant 0 : i32
    return %arg1, %arg0, %c0_i32 : i32, i32, i32
  }
  func.func @transform_1(%arg0: i32, %arg1: i32) -> (i32, i32) {
    %c0_i32 = arith.constant 0 : i32
    %c0_i32_0 = arith.constant 0 : i32
    %c0_i32_1 = arith.constant 0 : i32
    return %c0_i32, %c0_i32_0 : i32, i32
  }
  func.func @transform_2(%arg0: i32, %arg1: i32) -> (i32, i32) {
    %c0_i32 = arith.constant 0 : i32
    %c0_i32_0 = arith.constant 0 : i32
    %c0_i32_1 = arith.constant 0 : i32
    return %c0_i32, %c0_i32_0 : i32, i32
  }
  func.func @transform_3(%arg0: i32, %arg1: i32) -> (i32, i32) {
    %c0_i32 = arith.constant 0 : i32
    %c0_i32_0 = arith.constant 0 : i32
    %c0_i32_1 = arith.constant 0 : i32
    return %c0_i32, %c0_i32_0 : i32, i32
  }
  func.func @transform_4(%arg0: i32, %arg1: i32) -> (i32, i32) {
    %c0_i32 = arith.constant 0 : i32
    %c0_i32_0 = arith.constant 0 : i32
    %c0_i32_1 = arith.constant 0 : i32
    return %c0_i32, %c0_i32_0 : i32, i32
  }
  func.func @transform_5(%arg0: i32, %arg1: i32) -> (i32, i32) {
    %c0_i32 = arith.constant 0 : i32
    %c0_i32_0 = arith.constant 0 : i32
    %c0_i32_1 = arith.constant 0 : i32
    return %c0_i32, %c0_i32_0 : i32, i32
  }
  func.func @transform_6(%arg0: i32, %arg1: i32) -> (i32, i32) {
    %c0_i32 = arith.constant 0 : i32
    %c0_i32_0 = arith.constant 0 : i32
    return %arg0, %c0_i32 : i32, i32
  }
}

</mosaic_0001>

<llo_original>
// kernel: tpu_custom_call.1
$region0: #{tpu_custom_call.1}
  #allocation0 [shape = 'u32[]', space=smem, size = 0x4, offset = 0x4, fixed_abs, tag = 'smem constant byte address 0x4 - core index']
  #allocation1 [shape = 'u32[72,128]{1,0:T(1,128)}', space=vmem, size = 0x9000, scoped, tag = 'internal scratch']
  #allocation2 [shape = 'f32[16,128]{1,0:T(8,128)}', space=vmem, size = 0x2000, scoped, tag = 'scratch operand']
  %s0 = inlined_call_operand.hbm [shape: bf16[8,16,128], index: 0, kind: input, shape index: {}]
  %s1 = inlined_call_operand.hbm [shape: bf16[128,128], index: 1, kind: input, shape index: {}]
  %s2 = inlined_call_operand.hbm [shape: bf16[128,128], index: 2, kind: input, shape index: {}]
  %s3 = inlined_call_operand.vmem [shape: f32[1,128], index: 3, kind: input, shape index: {}]
  %s4 = inlined_call_operand.hbm [shape: bf16[128,128], index: 4, kind: input, shape index: {}]
  %s5 = inlined_call_operand.vmem [shape: f32[1,128], index: 5, kind: input, shape index: {}]
  %s6 = inlined_call_operand.hbm [shape: f32[16,128], index: 6, kind: output, shape index: {}]
  %s7 = sld [smem:[#allocation0]]
  $region58: #{tpu_custom_call.1} parent=0
    _
  %s9 = ssub.s32 1, %s7
  %s10 = scalar_select 0, %s9, %s7
  $region1: #{tpu_custom_call.1} parent=0
    #allocation3 [shape = 'u8[32768]{0}', space=vmem, size = 0x8000, scoped, tag = 'input window, operand 0, single buffered']
    #allocation4 [shape = 's32[1]{0}', space=sflag, size = 0x4, scoped, tag = 'scoped memory for tpu_custom_call.1']
    #allocation5 [shape = 's32[1]{0}', space=sflag, size = 0x4, scoped, tag = 'scoped memory for tpu_custom_call.1']
    #allocation6 [shape = 'u8[32768]{0}', space=vmem, size = 0x8000, scoped, tag = 'input window, operand 1, single buffered']
    #allocation7 [shape = 's32[1]{0}', space=sflag, size = 0x4, scoped, tag = 'scoped memory for tpu_custom_call.1']
    #allocation8 [shape = 'u8[32768]{0}', space=vmem, size = 0x8000, scoped, tag = 'input window, operand 2, single buffered']
    #allocation9 [shape = 'u8[32768]{0}', space=vmem, size = 0x8000, scoped, tag = 'input window, operand 4, single buffered']
    #allocation10 [shape = 's32[1]{0}', space=sflag, size = 0x4, scoped, tag = 'scoped memory for tpu_custom_call.1']
    #allocation11 [shape = 'u8[8192]{0}', space=vmem, size = 0x2000, scoped, tag = 'output window, operand 0, single buffered']
    %11 = vsyncpa [#allocation4], 0
    %12 = vsyncpa [#allocation7], 0
    %13 = vsyncpa [#allocation10], 0
    %14 = vsyncpa [#allocation5], 0
    // Predicated region
    $region2: #{tpu_custom_call.1} parent=1 // pred_check
      _
    $region3: #{tpu_custom_call.1} parent=1 // pred_check_branch
      %16 = sbr.rel (0) target = $region5
    $region4: #{tpu_custom_call.1} parent=1 // pred_region
      %18 = vsyncadd [#allocation4], 0
      %s19 = sshll.u32 %s0, 4
      %s20 = int_to_ptr.hbm [resolvable:$true] %s19
      %s21 = sshll.u32 [#allocation3], 4
      %s22 = int_to_ptr.vmem [resolvable:$true] %s21
      %27 = dma.hbm_to_vmem [thread:$0]  %s20, 1024, %s22, [#allocation4], 64, 64, 4
    $region5: #{tpu_custom_call.1} parent=1 // pred_fallthru
      _
    // Predicated region
    $region6: #{tpu_custom_call.1} parent=1 // pred_check
      _
    $region7: #{tpu_custom_call.1} parent=1 // pred_check_branch
      %29 = sbr.rel (0) target = $region9
    $region8: #{tpu_custom_call.1} parent=1 // pred_region
      %31 = vsyncadd [#allocation7], 0
      %s32 = sshll.u32 %s1, 4
      %s33 = int_to_ptr.hbm [resolvable:$true] %s32
      %s34 = sshll.u32 [#allocation6], 4
      %s35 = int_to_ptr.vmem [resolvable:$true] %s34
      %40 = dma.hbm_to_vmem [thread:$0]  %s33, 1024, %s35, [#allocation7], 64, 64, 4
    $region9: #{tpu_custom_call.1} parent=1 // pred_fallthru
      _
    // Predicated region
    $region10: #{tpu_custom_call.1} parent=1 // pred_check
      _
    $region11: #{tpu_custom_call.1} parent=1 // pred_check_branch
      %42 = sbr.rel (0) target = $region13
    $region12: #{tpu_custom_call.1} parent=1 // pred_region
      %44 = vsyncadd [#allocation7], 0
      %s45 = sshll.u32 %s2, 4
      %s46 = int_to_ptr.hbm [resolvable:$true] %s45
      %s47 = sshll.u32 [#allocation8], 4
      %s48 = int_to_ptr.vmem [resolvable:$true] %s47
      %53 = dma.hbm_to_vmem [thread:$0]  %s46, 1024, %s48, [#allocation7], 64, 64, 4
    $region13: #{tpu_custom_call.1} parent=1 // pred_fallthru
      _
    // Predicated region
    $region14: #{tpu_custom_call.1} parent=1 // pred_check
      _
    $region15: #{tpu_custom_call.1} parent=1 // pred_check_branch
      %55 = sbr.rel (0) target = $region17
    $region16: #{tpu_custom_call.1} parent=1 // pred_region
      _
    $region17: #{tpu_custom_call.1} parent=1 // pred_fallthru
      _
    // Predicated region
    $region18: #{tpu_custom_call.1} parent=1 // pred_check
      _
    $region19: #{tpu_custom_call.1} parent=1 // pred_check_branch
      %57 = sbr.rel (0) target = $region21
    $region20: #{tpu_custom_call.1} parent=1 // pred_region
      %59 = vsyncadd [#allocation10], 0
      %s60 = sshll.u32 %s4, 4
      %s61 = int_to_ptr.hbm [resolvable:$true] %s60
      %s62 = sshll.u32 [#allocation9], 4
      %s63 = int_to_ptr.vmem [resolvable:$true] %s62
      %68 = dma.hbm_to_vmem [thread:$0]  %s61, 1024, %s63, [#allocation10], 64, 64, 4
    $region21: #{tpu_custom_call.1} parent=1 // pred_fallthru
      _
    // Predicated region
    $region22: #{tpu_custom_call.1} parent=1 // pred_check
      _
    $region23: #{tpu_custom_call.1} parent=1 // pred_check_branch
      %70 = sbr.rel (0) target = $region25
    $region24: #{tpu_custom_call.1} parent=1 // pred_region
      _
    $region25: #{tpu_custom_call.1} parent=1 // pred_fallthru
      _
    // Predicated region
    $region26: #{tpu_custom_call.1} parent=1 // pred_check
      _
    $region27: #{tpu_custom_call.1} parent=1 // pred_check_branch
      %72 = sbr.rel (0) target = $region29
    $region28: #{tpu_custom_call.1} parent=1 // pred_region
      %74 = dma.done [#allocation4], 1024
    $region29: #{tpu_custom_call.1} parent=1 // pred_fallthru
      _
    // Predicated region
    $region30: #{tpu_custom_call.1} parent=1 // pred_check
      _
    $region31: #{tpu_custom_call.1} parent=1 // pred_check_branch
      %76 = sbr.rel (0) target = $region33
    $region32: #{tpu_custom_call.1} parent=1 // pred_region
      %78 = dma.done [#allocation7], 1024
    $region33: #{tpu_custom_call.1} parent=1 // pred_fallthru
      _
    // Predicated region
    $region34: #{tpu_custom_call.1} parent=1 // pred_check
      _
    $region35: #{tpu_custom_call.1} parent=1 // pred_check_branch
      %80 = sbr.rel (0) target = $region37
    $region36: #{tpu_custom_call.1} parent=1 // pred_region
      %82 = dma.done [#allocation7], 1024
    $region37: #{tpu_custom_call.1} parent=1 // pred_fallthru
      _
    // Predicated region
    $region38: #{tpu_custom_call.1} parent=1 // pred_check
      _
    $region39: #{tpu_custom_call.1} parent=1 // pred_check_branch
      %84 = sbr.rel (0) target = $region41
    $region40: #{tpu_custom_call.1} parent=1 // pred_region
      %86 = dma.done [#allocation10], 1024
    $region41: #{tpu_custom_call.1} parent=1 // pred_fallthru
      _
    %p87 = scmp.eq.s32.totalorder 0, 0
    // Predicated region
    $region42: #{tpu_custom_call.1} parent=1 // pred_check
      %p88 = pneg %p87
    $region43: #{tpu_custom_call.1} parent=1 // pred_check_branch
      %90 = sbr.rel (%p88) target = $region45
    $region44: #{tpu_custom_call.1} parent=1 // pred_region
      %91 = vst [vmem:[#allocation2] sm:$0xff] 0.0
      %92 = vst [vmem:[#allocation2 + $0x8] sm:$0xff] 0.0
    $region45: #{tpu_custom_call.1} parent=1 // pred_fallthru
      _
    %v93 = vld [vmem:[#allocation6] sm:$0xf]
    %v94 = vld [vmem:[#allocation6 + $0x4] sm:$0xf]
    %v95 = vld [vmem:[#allocation6 + $0x8] sm:$0xf]
    %v96 = vld [vmem:[#allocation6 + $0xc] sm:$0xf]
    %v97 = vld [vmem:[#allocation6 + $0x10] sm:$0xf]
    %v98 = vld [vmem:[#allocation6 + $0x14] sm:$0xf]
    %v99 = vld [vmem:[#allocation6 + $0x18] sm:$0xf]
    %v100 = vld [vmem:[#allocation6 + $0x1c] sm:$0xf]
    %v101 = vld [vmem:[#allocation6 + $0x20] sm:$0xf]
    %v102 = vld [vmem:[#allocation6 + $0x24] sm:$0xf]
    %v103 = vld [vmem:[#allocation6 + $0x28] sm:$0xf]
    %v104 = vld [vmem:[#allocation6 + $0x2c] sm:$0xf]
    %v105 = vld [vmem:[#allocation6 + $0x30] sm:$0xf]
    %v106 = vld [vmem:[#allocation6 + $0x34] sm:$0xf]
    %v107 = vld [vmem:[#allocation6 + $0x38] sm:$0xf]
    %v108 = vld [vmem:[#allocation6 + $0x3c] sm:$0xf]
    %v109 = vld [vmem:[#allocation8] sm:$0xf]
    %v110 = vld [vmem:[#allocation8 + $0x4] sm:$0xf]
    %v111 = vld [vmem:[#allocation8 + $0x8] sm:$0xf]
    %v112 = vld [vmem:[#allocation8 + $0xc] sm:$0xf]
    %v113 = vld [vmem:[#allocation8 + $0x10] sm:$0xf]
    %v114 = vld [vmem:[#allocation8 + $0x14] sm:$0xf]
    %v115 = vld [vmem:[#allocation8 + $0x18] sm:$0xf]
    %v116 = vld [vmem:[#allocation8 + $0x1c] sm:$0xf]
    %v117 = vld [vmem:[#allocation8 + $0x20] sm:$0xf]
    %v118 = vld [vmem:[#allocation8 + $0x24] sm:$0xf]
    %v119 = vld [vmem:[#allocation8 + $0x28] sm:$0xf]
    %v120 = vld [vmem:[#allocation8 + $0x2c] sm:$0xf]
    %v121 = vld [vmem:[#allocation8 + $0x30] sm:$0xf]
    %v122 = vld [vmem:[#allocation8 + $0x34] sm:$0xf]
    %v123 = vld [vmem:[#allocation8 + $0x38] sm:$0xf]
    %v124 = vld [vmem:[#allocation8 + $0x3c] sm:$0xf]
    %v125 = vld [vmem:[%s3] sm:$0x1]
    %v126 = vld [vmem:[#allocation2] sm:$0xff]
    %v127 = vld [vmem:[#allocation2 + $0x8] sm:$0xff]
    %v128 = vld [vmem:[#allocation3] sm:$0xf]
    %v129 = vld [vmem:[#allocation3 + $0x4] sm:$0xf]
    %v131 = vperm.slane %v125, 0
    %v135 = vunpack.c.l.b16 %v128
    %v136 = vunpack.c.l.b16 %v129
    %v137 = vpack.c.b16 %v136, %v135
    %v155 = vunpack.c.l.b16 %v93
    %v156 = vunpack.c.l.b16 %v94
    %v157 = vunpack.c.l.b16 %v95
    %v158 = vunpack.c.l.b16 %v96
    %v159 = vunpack.c.l.b16 %v97
    %v160 = vunpack.c.l.b16 %v98
    %v161 = vunpack.c.l.b16 %v99
    %v162 = vunpack.c.l.b16 %v100
    %v163 = vunpack.c.l.b16 %v101
    %v164 = vunpack.c.l.b16 %v102
    %v165 = vunpack.c.l.b16 %v103
    %v166 = vunpack.c.l.b16 %v104
    %v167 = vunpack.c.l.b16 %v105
    %v168 = vunpack.c.l.b16 %v106
    %v169 = vunpack.c.l.b16 %v107
    %v170 = vunpack.c.l.b16 %v108
    %v171 = vpack.c.b16 %v156, %v155
    %v172 = vpack.c.b16 %v158, %v157
    %v173 = vpack.c.b16 %v160, %v159
    %v174 = vpack.c.b16 %v162, %v161
    %v175 = vpack.c.b16 %v164, %v163
    %v176 = vpack.c.b16 %v166, %v165
    %v177 = vpack.c.b16 %v168, %v167
    %v178 = vpack.c.b16 %v170, %v169
    %187 = vmatpush.bf16.msra.mxu0 %v178
    %188 = vmatpush.bf16.msra.mxu0 %v177
    %189 = vmatpush.bf16.msra.mxu0 %v176
    %190 = vmatpush.bf16.msra.mxu0 %v175
    %191 = vmatpush.bf16.msra.mxu0 %v174
    %192 = vmatpush.bf16.msra.mxu0 %v173
    %193 = vmatpush.bf16.msra.mxu0 %v172
    %194 = vmatpush.bf16.msra.mxu0 %v171
    %195 = vmatmul.bf16.gmra.mxu0 %v137
    %v196 = vpop.f32.mrf.mxu0
    %v197 = vadd.f32 %v131, %v196
    %v198 = vpop.f32.mrf.mxu0
    %v199 = vadd.f32 %v131, %v198
    %200 = vdwg.mxu0
    %v201 = vpack.c.bf16 %v127, %v126
    %v218 = vunpack.c.l.b16 %v109
    %v219 = vunpack.c.l.b16 %v110
    %v220 = vunpack.c.l.b16 %v111
    %v221 = vunpack.c.l.b16 %v112
    %v222 = vunpack.c.l.b16 %v113
    %v223 = vunpack.c.l.b16 %v114
    %v224 = vunpack.c.l.b16 %v115
    %v225 = vunpack.c.l.b16 %v116
    %v226 = vunpack.c.l.b16 %v117
    %v227 = vunpack.c.l.b16 %v118
    %v228 = vunpack.c.l.b16 %v119
    %v229 = vunpack.c.l.b16 %v120
    %v230 = vunpack.c.l.b16 %v121
    %v231 = vunpack.c.l.b16 %v122
    %v232 = vunpack.c.l.b16 %v123
    %v233 = vunpack.c.l.b16 %v124
    %v234 = vpack.c.b16 %v219, %v218
    %v235 = vpack.c.b16 %v221, %v220
    %v236 = vpack.c.b16 %v223, %v222
    %v237 = vpack.c.b16 %v225, %v224
    %v238 = vpack.c.b16 %v227, %v226
    %v239 = vpack.c.b16 %v229, %v228
    %v240 = vpack.c.b16 %v231, %v230
    %v241 = vpack.c.b16 %v233, %v232
    %250 = vmatpush.bf16.msra.mxu0 %v241
    %251 = vmatpush.bf16.msra.mxu0 %v240
    %252 = vmatpush.bf16.msra.mxu0 %v239
    %253 = vmatpush.bf16.msra.mxu0 %v238
    %254 = vmatpush.bf16.msra.mxu0 %v237
    %255 = vmatpush.bf16.msra.mxu0 %v236
    %256 = vmatpush.bf16.msra.mxu0 %v235
    %257 = vmatpush.bf16.msra.mxu0 %v234
    %258 = vmatmul.bf16.gmra.mxu0 %v201
    %v259 = vpop.f32.mrf.mxu0
    %v260 = vadd.f32 0.0, %v259
    %v261 = vpop.f32.mrf.mxu0
    %v262 = vadd.f32 0.0, %v261
    %263 = vdwg.mxu0
    %v264 = vadd.f32 %v197, %v260
    %v265 = vadd.f32 %v199, %v262
    %v266 = vtanh.pop %v264
    %v267 = vtanh.pop %v265
    %s268 = scalar_lea.vmem [#allocation3], 8
    %v269 = vld [vmem:[%s268] sm:$0xf]
    %v270 = vld [vmem:[%s268 + $0x4] sm:$0xf]
    %v273 = vunpack.c.l.b16 %v269
    %v274 = vunpack.c.l.b16 %v270
    %v275 = vpack.c.b16 %v274, %v273
    %277 = vmatpush.bf16.msra.mxu0 %v178
    %278 = vmatpush.bf16.msra.mxu0 %v177
    %279 = vmatpush.bf16.msra.mxu0 %v176
    %280 = vmatpush.bf16.msra.mxu0 %v175
    %281 = vmatpush.bf16.msra.mxu0 %v174
    %282 = vmatpush.bf16.msra.mxu0 %v173
    %283 = vmatpush.bf16.msra.mxu0 %v172
    %284 = vmatpush.bf16.msra.mxu0 %v171
    %285 = vmatmul.bf16.gmra.mxu0 %v275
    %v286 = vpop.f32.mrf.mxu0
    %v287 = vadd.f32 %v131, %v286
    %v288 = vpop.f32.mrf.mxu0
    %v289 = vadd.f32 %v131, %v288
    %290 = vdwg.mxu0
    %v291 = vpack.c.bf16 %v267, %v266
    %292 = vmatpush.bf16.msra.mxu0 %v241
    %293 = vmatpush.bf16.msra.mxu0 %v240
    %294 = vmatpush.bf16.msra.mxu0 %v239
    %295 = vmatpush.bf16.msra.mxu0 %v238
    %296 = vmatpush.bf16.msra.mxu0 %v237
    %297 = vmatpush.bf16.msra.mxu0 %v236
    %298 = vmatpush.bf16.msra.mxu0 %v235
    %299 = vmatpush.bf16.msra.mxu0 %v234
    %300 = vmatmul.bf16.gmra.mxu0 %v291
    %v301 = vpop.f32.mrf.mxu0
    %v302 = vadd.f32 0.0, %v301
    %v303 = vpop.f32.mrf.mxu0
    %v304 = vadd.f32 0.0, %v303
    %305 = vdwg.mxu0
    %v306 = vadd.f32 %v287, %v302
    %v307 = vadd.f32 %v289, %v304
    %v308 = vtanh.pop %v306
    %v309 = vtanh.pop %v307
    %s310 = scalar_lea.vmem [#allocation3], 16
    %v311 = vld [vmem:[%s310] sm:$0xf]
    %v312 = vld [vmem:[%s310 + $0x4] sm:$0xf]
    %v315 = vunpack.c.l.b16 %v311
    %v316 = vunpack.c.l.b16 %v312
    %v317 = vpack.c.b16 %v316, %v315
    %319 = vmatpush.bf16.msra.mxu0 %v178
    %320 = vmatpush.bf16.msra.mxu0 %v177
    %321 = vmatpush.bf16.msra.mxu0 %v176
    %322 = vmatpush.bf16.msra.mxu0 %v175
    %323 = vmatpush.bf16.msra.mxu0 %v174
    %324 = vmatpush.bf16.msra.mxu0 %v173
    %325 = vmatpush.bf16.msra.mxu0 %v172
    %326 = vmatpush.bf16.msra.mxu0 %v171
    %327 = vmatmul.bf16.gmra.mxu0 %v317
    %v328 = vpop.f32.mrf.mxu0
    %v329 = vadd.f32 %v131, %v328
    %v330 = vpop.f32.mrf.mxu0
    %v331 = vadd.f32 %v131, %v330
    %332 = vdwg.mxu0
    %v333 = vpack.c.bf16 %v309, %v308
    %334 = vmatpush.bf16.msra.mxu0 %v241
    %335 = vmatpush.bf16.msra.mxu0 %v240
    %336 = vmatpush.bf16.msra.mxu0 %v239
    %337 = vmatpush.bf16.msra.mxu0 %v238
    %338 = vmatpush.bf16.msra.mxu0 %v237
    %339 = vmatpush.bf16.msra.mxu0 %v236
    %340 = vmatpush.bf16.msra.mxu0 %v235
    %341 = vmatpush.bf16.msra.mxu0 %v234
    %342 = vmatmul.bf16.gmra.mxu0 %v333
    %v343 = vpop.f32.mrf.mxu0
    %v344 = vadd.f32 0.0, %v343
    %v345 = vpop.f32.mrf.mxu0
    %v346 = vadd.f32 0.0, %v345
    %347 = vdwg.mxu0
    %v348 = vadd.f32 %v329, %v344
    %v349 = vadd.f32 %v331, %v346
    %v350 = vtanh.pop %v348
    %v351 = vtanh.pop %v349
    %s352 = scalar_lea.vmem [#allocation3], 24
    %v353 = vld [vmem:[%s352] sm:$0xf]
    %v354 = vld [vmem:[%s352 + $0x4] sm:$0xf]
    %v357 = vunpack.c.l.b16 %v353
    %v358 = vunpack.c.l.b16 %v354
    %v359 = vpack.c.b16 %v358, %v357
    %361 = vmatpush.bf16.msra.mxu0 %v178
    %362 = vmatpush.bf16.msra.mxu0 %v177
    %363 = vmatpush.bf16.msra.mxu0 %v176
    %364 = vmatpush.bf16.msra.mxu0 %v175
    %365 = vmatpush.bf16.msra.mxu0 %v174
    %366 = vmatpush.bf16.msra.mxu0 %v173
    %367 = vmatpush.bf16.msra.mxu0 %v172
    %368 = vmatpush.bf16.msra.mxu0 %v171
    %369 = vmatmul.bf16.gmra.mxu0 %v359
    %v370 = vpop.f32.mrf.mxu0
    %v371 = vadd.f32 %v131, %v370
    %v372 = vpop.f32.mrf.mxu0
    %v373 = vadd.f32 %v131, %v372
    %374 = vdwg.mxu0
    %v375 = vpack.c.bf16 %v351, %v350
    %376 = vmatpush.bf16.msra.mxu0 %v241
    %377 = vmatpush.bf16.msra.mxu0 %v240
    %378 = vmatpush.bf16.msra.mxu0 %v239
    %379 = vmatpush.bf16.msra.mxu0 %v238
    %380 = vmatpush.bf16.msra.mxu0 %v237
    %381 = vmatpush.bf16.msra.mxu0 %v236
    %382 = vmatpush.bf16.msra.mxu0 %v235
    %383 = vmatpush.bf16.msra.mxu0 %v234
    %384 = vmatmul.bf16.gmra.mxu0 %v375
    %v385 = vpop.f32.mrf.mxu0
    %v386 = vadd.f32 0.0, %v385
    %v387 = vpop.f32.mrf.mxu0
    %v388 = vadd.f32 0.0, %v387
    %389 = vdwg.mxu0
    %v390 = vadd.f32 %v371, %v386
    %v391 = vadd.f32 %v373, %v388
    %v392 = vtanh.pop %v390
    %v393 = vtanh.pop %v391
    %s394 = scalar_lea.vmem [#allocation3], 32
    %v395 = vld [vmem:[%s394] sm:$0xf]
    %v396 = vld [vmem:[%s394 + $0x4] sm:$0xf]
    %v399 = vunpack.c.l.b16 %v395
    %v400 = vunpack.c.l.b16 %v396
    %v401 = vpack.c.b16 %v400, %v399
    %403 = vmatpush.bf16.msra.mxu0 %v178
    %404 = vmatpush.bf16.msra.mxu0 %v177
    %405 = vmatpush.bf16.msra.mxu0 %v176
    %406 = vmatpush.bf16.msra.mxu0 %v175
    %407 = vmatpush.bf16.msra.mxu0 %v174
    %408 = vmatpush.bf16.msra.mxu0 %v173
    %409 = vmatpush.bf16.msra.mxu0 %v172
    %410 = vmatpush.bf16.msra.mxu0 %v171
    %411 = vmatmul.bf16.gmra.mxu0 %v401
    %v412 = vpop.f32.mrf.mxu0
    %v413 = vadd.f32 %v131, %v412
    %v414 = vpop.f32.mrf.mxu0
    %v415 = vadd.f32 %v131, %v414
    %416 = vdwg.mxu0
    %v417 = vpack.c.bf16 %v393, %v392
    %418 = vmatpush.bf16.msra.mxu0 %v241
    %419 = vmatpush.bf16.msra.mxu0 %v240
    %420 = vmatpush.bf16.msra.mxu0 %v239
    %421 = vmatpush.bf16.msra.mxu0 %v238
    %422 = vmatpush.bf16.msra.mxu0 %v237
    %423 = vmatpush.bf16.msra.mxu0 %v236
    %424 = vmatpush.bf16.msra.mxu0 %v235
    %425 = vmatpush.bf16.msra.mxu0 %v234
    %426 = vmatmul.bf16.gmra.mxu0 %v417
    %v427 = vpop.f32.mrf.mxu0
    %v428 = vadd.f32 0.0, %v427
    %v429 = vpop.f32.mrf.mxu0
    %v430 = vadd.f32 0.0, %v429
    %431 = vdwg.mxu0
    %v432 = vadd.f32 %v413, %v428
    %v433 = vadd.f32 %v415, %v430
    %v434 = vtanh.pop %v432
    %v435 = vtanh.pop %v433
    %s436 = scalar_lea.vmem [#allocation3], 40
    %v437 = vld [vmem:[%s436] sm:$0xf]
    %v438 = vld [vmem:[%s436 + $0x4] sm:$0xf]
    %v441 = vunpack.c.l.b16 %v437
    %v442 = vunpack.c.l.b16 %v438
    %v443 = vpack.c.b16 %v442, %v441
    %445 = vmatpush.bf16.msra.mxu0 %v178
    %446 = vmatpush.bf16.msra.mxu0 %v177
    %447 = vmatpush.bf16.msra.mxu0 %v176
    %448 = vmatpush.bf16.msra.mxu0 %v175
    %449 = vmatpush.bf16.msra.mxu0 %v174
    %450 = vmatpush.bf16.msra.mxu0 %v173
    %451 = vmatpush.bf16.msra.mxu0 %v172
    %452 = vmatpush.bf16.msra.mxu0 %v171
    %453 = vmatmul.bf16.gmra.mxu0 %v443
    %v454 = vpop.f32.mrf.mxu0
    %v455 = vadd.f32 %v131, %v454
    %v456 = vpop.f32.mrf.mxu0
    %v457 = vadd.f32 %v131, %v456
    %458 = vdwg.mxu0
    %v459 = vpack.c.bf16 %v435, %v434
    %460 = vmatpush.bf16.msra.mxu0 %v241
    %461 = vmatpush.bf16.msra.mxu0 %v240
    %462 = vmatpush.bf16.msra.mxu0 %v239
    %463 = vmatpush.bf16.msra.mxu0 %v238
    %464 = vmatpush.bf16.msra.mxu0 %v237
    %465 = vmatpush.bf16.msra.mxu0 %v236
    %466 = vmatpush.bf16.msra.mxu0 %v235
    %467 = vmatpush.bf16.msra.mxu0 %v234
    %468 = vmatmul.bf16.gmra.mxu0 %v459
    %v469 = vpop.f32.mrf.mxu0
    %v470 = vadd.f32 0.0, %v469
    %v471 = vpop.f32.mrf.mxu0
    %v472 = vadd.f32 0.0, %v471
    %473 = vdwg.mxu0
    %v474 = vadd.f32 %v455, %v470
    %v475 = vadd.f32 %v457, %v472
    %v476 = vtanh.pop %v474
    %v477 = vtanh.pop %v475
    %s478 = scalar_lea.vmem [#allocation3], 48
    %v479 = vld [vmem:[%s478] sm:$0xf]
    %v480 = vld [vmem:[%s478 + $0x4] sm:$0xf]
    %v483 = vunpack.c.l.b16 %v479
    %v484 = vunpack.c.l.b16 %v480
    %v485 = vpack.c.b16 %v484, %v483
    %487 = vmatpush.bf16.msra.mxu0 %v178
    %488 = vmatpush.bf16.msra.mxu0 %v177
    %489 = vmatpush.bf16.msra.mxu0 %v176
    %490 = vmatpush.bf16.msra.mxu0 %v175
    %491 = vmatpush.bf16.msra.mxu0 %v174
    %492 = vmatpush.bf16.msra.mxu0 %v173
    %493 = vmatpush.bf16.msra.mxu0 %v172
    %494 = vmatpush.bf16.msra.mxu0 %v171
    %495 = vmatmul.bf16.gmra.mxu0 %v485
    %v496 = vpop.f32.mrf.mxu0
    %v497 = vadd.f32 %v131, %v496
    %v498 = vpop.f32.mrf.mxu0
    %v499 = vadd.f32 %v131, %v498
    %500 = vdwg.mxu0
    %v501 = vpack.c.bf16 %v477, %v476
    %502 = vmatpush.bf16.msra.mxu0 %v241
    %503 = vmatpush.bf16.msra.mxu0 %v240
    %504 = vmatpush.bf16.msra.mxu0 %v239
    %505 = vmatpush.bf16.msra.mxu0 %v238
    %506 = vmatpush.bf16.msra.mxu0 %v237
    %507 = vmatpush.bf16.msra.mxu0 %v236
    %508 = vmatpush.bf16.msra.mxu0 %v235
    %509 = vmatpush.bf16.msra.mxu0 %v234
    %510 = vmatmul.bf16.gmra.mxu0 %v501
    %v511 = vpop.f32.mrf.mxu0
    %v512 = vadd.f32 0.0, %v511
    %v513 = vpop.f32.mrf.mxu0
    %v514 = vadd.f32 0.0, %v513
    %515 = vdwg.mxu0
    %v516 = vadd.f32 %v497, %v512
    %v517 = vadd.f32 %v499, %v514
    %v518 = vtanh.pop %v516
    %v519 = vtanh.pop %v517
    %s520 = scalar_lea.vmem [#allocation3], 56
    %v521 = vld [vmem:[%s520] sm:$0xf]
    %v522 = vld [vmem:[%s520 + $0x4] sm:$0xf]
    %v525 = vunpack.c.l.b16 %v521
    %v526 = vunpack.c.l.b16 %v522
    %v527 = vpack.c.b16 %v526, %v525
    %529 = vmatpush.bf16.msra.mxu0 %v178
    %530 = vmatpush.bf16.msra.mxu0 %v177
    %531 = vmatpush.bf16.msra.mxu0 %v176
    %532 = vmatpush.bf16.msra.mxu0 %v175
    %533 = vmatpush.bf16.msra.mxu0 %v174
    %534 = vmatpush.bf16.msra.mxu0 %v173
    %535 = vmatpush.bf16.msra.mxu0 %v172
    %536 = vmatpush.bf16.msra.mxu0 %v171
    %537 = vmatmul.bf16.gmra.mxu0 %v527
    %v538 = vpop.f32.mrf.mxu0
    %v539 = vadd.f32 %v131, %v538
    %v540 = vpop.f32.mrf.mxu0
    %v541 = vadd.f32 %v131, %v540
    %542 = vdwg.mxu0
    %v543 = vpack.c.bf16 %v519, %v518
    %544 = vmatpush.bf16.msra.mxu0 %v241
    %545 = vmatpush.bf16.msra.mxu0 %v240
    %546 = vmatpush.bf16.msra.mxu0 %v239
    %547 = vmatpush.bf16.msra.mxu0 %v238
    %548 = vmatpush.bf16.msra.mxu0 %v237
    %549 = vmatpush.bf16.msra.mxu0 %v236
    %550 = vmatpush.bf16.msra.mxu0 %v235
    %551 = vmatpush.bf16.msra.mxu0 %v234
    %552 = vmatmul.bf16.gmra.mxu0 %v543
    %v553 = vpop.f32.mrf.mxu0
    %v554 = vadd.f32 0.0, %v553
    %v555 = vpop.f32.mrf.mxu0
    %v556 = vadd.f32 0.0, %v555
    %557 = vdwg.mxu0
    %v558 = vadd.f32 %v539, %v554
    %v559 = vadd.f32 %v541, %v556
    %v560 = vtanh.pop %v558
    %v561 = vtanh.pop %v559
    %562 = vst [vmem:[#allocation2] sm:$0xff] %v560
    %563 = vst [vmem:[#allocation2 + $0x8] sm:$0xff] %v561
    // Predicated region
    $region46: #{tpu_custom_call.1} parent=1 // pred_check
      %p564 = pneg %p87
    $region47: #{tpu_custom_call.1} parent=1 // pred_check_branch
      %566 = sbr.rel (%p564) target = $region49
    $region48: #{tpu_custom_call.1} parent=1 // pred_region
      %v567 = vld [vmem:[#allocation2] sm:$0xff]
      %v568 = vld [vmem:[#allocation2 + $0x8] sm:$0xff]
      %v569 = vpack.c.bf16 %v568, %v567
      %v570 = vld [vmem:[#allocation9] sm:$0xf]
      %v571 = vld [vmem:[#allocation9 + $0x4] sm:$0xf]
      %v572 = vld [vmem:[#allocation9 + $0x8] sm:$0xf]
      %v573 = vld [vmem:[#allocation9 + $0xc] sm:$0xf]
      %v574 = vld [vmem:[#allocation9 + $0x10] sm:$0xf]
      %v575 = vld [vmem:[#allocation9 + $0x14] sm:$0xf]
      %v576 = vld [vmem:[#allocation9 + $0x18] sm:$0xf]
      %v577 = vld [vmem:[#allocation9 + $0x1c] sm:$0xf]
      %v578 = vld [vmem:[#allocation9 + $0x20] sm:$0xf]
      %v579 = vld [vmem:[#allocation9 + $0x24] sm:$0xf]
      %v580 = vld [vmem:[#allocation9 + $0x28] sm:$0xf]
      %v581 = vld [vmem:[#allocation9 + $0x2c] sm:$0xf]
      %v582 = vld [vmem:[#allocation9 + $0x30] sm:$0xf]
      %v583 = vld [vmem:[#allocation9 + $0x34] sm:$0xf]
      %v584 = vld [vmem:[#allocation9 + $0x38] sm:$0xf]
      %v585 = vld [vmem:[#allocation9 + $0x3c] sm:$0xf]
      %v586 = vld [vmem:[%s5] sm:$0x1]
      %v588 = vperm.slane %v586, 0
      %v606 = vunpack.c.l.b16 %v570
      %v607 = vunpack.c.l.b16 %v571
      %v608 = vunpack.c.l.b16 %v572
      %v609 = vunpack.c.l.b16 %v573
      %v610 = vunpack.c.l.b16 %v574
      %v611 = vunpack.c.l.b16 %v575
      %v612 = vunpack.c.l.b16 %v576
      %v613 = vunpack.c.l.b16 %v577
      %v614 = vunpack.c.l.b16 %v578
      %v615 = vunpack.c.l.b16 %v579
      %v616 = vunpack.c.l.b16 %v580
      %v617 = vunpack.c.l.b16 %v581
      %v618 = vunpack.c.l.b16 %v582
      %v619 = vunpack.c.l.b16 %v583
      %v620 = vunpack.c.l.b16 %v584
      %v621 = vunpack.c.l.b16 %v585
      %v622 = vpack.c.b16 %v607, %v606
      %v623 = vpack.c.b16 %v609, %v608
      %v624 = vpack.c.b16 %v611, %v610
      %v625 = vpack.c.b16 %v613, %v612
      %v626 = vpack.c.b16 %v615, %v614
      %v627 = vpack.c.b16 %v617, %v616
      %v628 = vpack.c.b16 %v619, %v618
      %v629 = vpack.c.b16 %v621, %v620
      %638 = vmatpush.bf16.msra.mxu0 %v629
      %639 = vmatpush.bf16.msra.mxu0 %v628
      %640 = vmatpush.bf16.msra.mxu0 %v627
      %641 = vmatpush.bf16.msra.mxu0 %v626
      %642 = vmatpush.bf16.msra.mxu0 %v625
      %643 = vmatpush.bf16.msra.mxu0 %v624
      %644 = vmatpush.bf16.msra.mxu0 %v623
      %645 = vmatpush.bf16.msra.mxu0 %v622
      %646 = vmatmul.bf16.gmra.mxu0 %v569
      %v647 = vpop.f32.mrf.mxu0
      %v648 = vadd.f32 %v588, %v647
      %v649 = vpop.f32.mrf.mxu0
      %v650 = vadd.f32 %v588, %v649
      %651 = vdwg.mxu0
      %652 = vst [vmem:[#allocation11] sm:$0xff] %v648
      %653 = vst [vmem:[#allocation11 + $0x8] sm:$0xff] %v650
    $region49: #{tpu_custom_call.1} parent=1 // pred_fallthru
      _
    // Predicated region
    $region50: #{tpu_custom_call.1} parent=1 // pred_check
      _
    $region51: #{tpu_custom_call.1} parent=1 // pred_check_branch
      %655 = sbr.rel (0) target = $region53
    $region52: #{tpu_custom_call.1} parent=1 // pred_region
      %657 = vsyncadd [#allocation5], 0
      %s658 = sshll.u32 [#allocation11], 4
      %s659 = int_to_ptr.vmem [resolvable:$true] %s658
      %s660 = sshll.u32 %s6, 4
      %s661 = int_to_ptr.hbm [resolvable:$true] %s660
      %666 = dma.vmem_to_hbm [thread:$0]  %s659, 256, %s661, [#allocation5], 128, 128, 8
    $region53: #{tpu_custom_call.1} parent=1 // pred_fallthru
      _
    // Predicated region
    $region54: #{tpu_custom_call.1} parent=1 // pred_check
      _
    $region55: #{tpu_custom_call.1} parent=1 // pred_check_branch
      %668 = sbr.rel (0) target = $region57
    $region56: #{tpu_custom_call.1} parent=1 // pred_region
      %670 = dma.done [#allocation5], 256
    $region57: #{tpu_custom_call.1} parent=1 // pred_fallthru
      _
    %671 = vsyncpa [#allocation4], 1
    %672 = vsyncpa [#allocation7], 1
    %673 = vsyncpa [#allocation10], 1
    %674 = vsyncpa [#allocation5], 1

</llo_original>
